<compile_context>
chip_gen: v6e
topology: v6e:2x2x1
jax: 0.10.0
libtpu: 0.0.40
codegen_flags: <defaults>
</compile_context>

<pallas_src>
import functools

import jax
import jax.numpy as jnp
from jax.experimental import pallas as pl
from jax.experimental.pallas import tpu as pltpu


# ---------------------------------------------------------------------------
# Fused Linear (+ bias + optional ReLU / row-softmax) kernel
# ---------------------------------------------------------------------------
def _linear_kernel(x_ref, w_ref, b_ref, o_ref, acc_ref, *, activation):
    # x_ref:  (tm, tk)   input tile
    # w_ref:  (tn, tk)   weight tile in PyTorch [D_out, D_in] layout
    # b_ref:  (1, tn)    bias tile
    # o_ref:  (tm, tn)   output tile
    # acc_ref:(tm, tn)   f32 accumulator scratch (resident across K)
    k = pl.program_id(2)

    @pl.when(k == 0)
    def _():
        acc_ref[...] = jnp.zeros_like(acc_ref)

    # Contract x's dim 1 with w's dim 1: (tm, tk) x (tn, tk) -> (tm, tn).
    acc_ref[...] += jax.lax.dot_general(
        x_ref[...], w_ref[...],
        dimension_numbers=(((1,), (1,)), ((), ())),
        preferred_element_type=jnp.float32,
        precision=jax.lax.Precision.HIGHEST,
    )

    @pl.when(k == pl.num_programs(2) - 1)
    def _():
        y = acc_ref[...] + b_ref[...]
        if activation == "relu":
            y = jnp.maximum(y, 0.0)
        elif activation == "softmax":
            # Full output row is resident in this tile (tn == D_out enforced
            # by the wrapper), so a row softmax is safe here.
            m = jnp.max(y, axis=-1, keepdims=True)
            e = jnp.exp(y - m)
            y = e / jnp.sum(e, axis=-1, keepdims=True)
        o_ref[...] = y.astype(o_ref.dtype)


def _pick_tile(full, target, align):
    """Largest tile <= target that is a multiple of `align` and divides `full`;
    falls back to the full extent (always a legal block shape)."""
    if full <= target:
        return full
    t = (min(target, full) // align) * align
    while t >= align:
        if full % t == 0:
            return t
        t -= align
    return full


def linear(x, w, b, activation=None, *,
           tm_target=256, tn_target=512, tk_target=512):
    """y = activation(x @ w.T + b), with w in PyTorch nn.Linear layout."""
    N, D_in = x.shape
    D_out, D_in_w = w.shape
    assert D_in == D_in_w, (D_in, D_in_w)

    tm = _pick_tile(N, tm_target, 8)
    tk = _pick_tile(D_in, tk_target, 128)
    if activation == "softmax":
        tn = D_out  # softmax needs the whole output row in one tile
    else:
        tn = _pick_tile(D_out, tn_target, 128)

    grid = (N // tm, D_out // tn, D_in // tk)
    b2 = b.reshape(1, D_out)

    kernel = functools.partial(_linear_kernel, activation=activation)
    return pl.pallas_call(
        kernel,
        out_shape=jax.ShapeDtypeStruct((N, D_out), x.dtype),
        grid_spec=pltpu.PrefetchScalarGridSpec(
            num_scalar_prefetch=0,
            grid=grid,
            in_specs=[
                pl.BlockSpec((tm, tk), lambda i, j, k: (i, k)),
                pl.BlockSpec((tn, tk), lambda i, j, k: (j, k)),
                pl.BlockSpec((1, tn), lambda i, j, k: (0, j)),
            ],
            out_specs=pl.BlockSpec((tm, tn), lambda i, j, k: (i, j)),
            scratch_shapes=[pltpu.VMEM((tm, tn), jnp.float32)],
        ),
        compiler_params=pltpu.CompilerParams(
            dimension_semantics=("parallel", "parallel", "arbitrary"),
        ),
    )(x, w, b2)


# ---------------------------------------------------------------------------
# Reparameterization kernel: z = eps * exp(0.5 * log_var) + means
# ---------------------------------------------------------------------------
def _reparam_kernel(means_ref, logvar_ref, eps_ref, z_ref):
    std = jnp.exp(0.5 * logvar_ref[...])
    z_ref[...] = eps_ref[...] * std + means_ref[...]


def reparameterize(means, log_var, eps):
    N, L = means.shape
    spec = pl.BlockSpec((N, L), lambda i: (0, 0))
    return pl.pallas_call(
        _reparam_kernel,
        out_shape=jax.ShapeDtypeStruct((N, L), means.dtype),
        grid_spec=pltpu.PrefetchScalarGridSpec(
            num_scalar_prefetch=0,
            grid=(1,),
            in_specs=[spec, spec, spec],
            out_specs=spec,
        ),
        compiler_params=pltpu.CompilerParams(
            dimension_semantics=("arbitrary",),
        ),
    )(means, log_var, eps)


# ---------------------------------------------------------------------------
# CVAE parameters (deterministic nn.Linear-style init) and forward pass
# ---------------------------------------------------------------------------
def _init_linear(key, in_size, out_size):
    kw, kb = jax.random.split(key)
    bound = 1.0 / (in_size ** 0.5)
    w = jax.random.uniform(kw, (out_size, in_size), minval=-bound, maxval=bound,
                           dtype=jnp.float32)
    b = jax.random.uniform(kb, (out_size,), minval=-bound, maxval=bound,
                           dtype=jnp.float32)
    return w, b


def init_cvae_params(key, encoder_layer_sizes, latent_size,
                     decoder_layer_sizes, nlabels):
    n_layers = (len(encoder_layer_sizes) - 1) + 2 + len(decoder_layer_sizes)
    keys = jax.random.split(key, n_layers)
    ki = 0
    params = {"enc": [], "dec": []}
    for in_s, out_s in zip(encoder_layer_sizes[:-1], encoder_layer_sizes[1:]):
        params["enc"].append(_init_linear(keys[ki], in_s, out_s)); ki += 1
    params["w_mu"], params["b_mu"] = _init_linear(
        keys[ki], encoder_layer_sizes[-1], latent_size); ki += 1
    params["w_lv"], params["b_lv"] = _init_linear(
        keys[ki], encoder_layer_sizes[-1], latent_size); ki += 1
    dec_in = [latent_size + nlabels] + decoder_layer_sizes[:-1]
    for in_s, out_s in zip(dec_in, decoder_layer_sizes):
        params["dec"].append(_init_linear(keys[ki], in_s, out_s)); ki += 1
    return params


def cvae_forward(params, x, c, eps):
    """Pallas-kernel forward: returns (recon_x, means, log_var, z)."""
    h = jnp.concatenate([x, c], axis=-1)              # glue (torch.cat)
    for w, b in params["enc"]:
        h = linear(h, w, b, activation="relu")
    means = linear(h, params["w_mu"], params["b_mu"], activation=None)
    log_var = linear(h, params["w_lv"], params["b_lv"], activation=None)
    z = reparameterize(means, log_var, eps)
    d = jnp.concatenate([z, c], axis=-1)              # glue (torch.cat)
    n_dec = len(params["dec"])
    for i, (w, b) in enumerate(params["dec"]):
        act = "relu" if i + 1 < n_dec else "softmax"
        d = linear(d, w, b, activation=act)
    return d, means, log_var, z


def cvae_reference(params, x, c, eps):
    """Pure-JAX reference for correctness checking."""
    def dot_t(a, w):
        return jax.lax.dot_general(
            a, w, dimension_numbers=(((1,), (1,)), ((), ())),
            preferred_element_type=jnp.float32,
            precision=jax.lax.Precision.HIGHEST)

    h = jnp.concatenate([x, c], axis=-1)
    for w, b in params["enc"]:
        h = jnp.maximum(dot_t(h, w) + b, 0.0)
    means = dot_t(h, params["w_mu"]) + params["b_mu"]
    log_var = dot_t(h, params["w_lv"]) + params["b_lv"]
    z = eps * jnp.exp(0.5 * log_var) + means
    d = jnp.concatenate([z, c], axis=-1)
    n_dec = len(params["dec"])
    for i, (w, b) in enumerate(params["dec"]):
        d = dot_t(d, w) + b
        if i + 1 < n_dec:
            d = jnp.maximum(d, 0.0)
        else:
            d = jax.nn.softmax(d, axis=1)
    return d, means, log_var, z


if __name__ == "__main__":
    key = jax.random.PRNGKey(0)
    k_params, k_x, k_c, k_eps = jax.random.split(key, 4)

    # Small shapes consistent with the module.
    batch = 8
    x_dim = 24
    nlabels = 8
    latent_size = 16
    encoder_layer_sizes = [x_dim + nlabels, 64]       # first entry = input dim
    decoder_layer_sizes = [64, x_dim]                 # last entry = recon dim

    params = init_cvae_params(k_params, encoder_layer_sizes, latent_size,
                              decoder_layer_sizes, nlabels)

    x = jax.random.normal(k_x, (batch, x_dim), dtype=jnp.float32)
    c = jax.random.normal(k_c, (batch, nlabels), dtype=jnp.float32)
    # TODO(synk): torch.randn eps is drawn host-side with jax.random (not the
    # in-kernel pltpu PRNG) so the Pallas path is deterministically checkable.
    eps = jax.random.normal(k_eps, (batch, latent_size), dtype=jnp.float32)

    recon_x, means, log_var, z = cvae_forward(params, x, c, eps)
    jax.block_until_ready(recon_x)

    r_recon, r_means, r_lv, r_z = cvae_reference(params, x, c, eps)
    assert jnp.allclose(means, r_means, atol=1e-4, rtol=1e-4), "means mismatch"
    assert jnp.allclose(log_var, r_lv, atol=1e-4, rtol=1e-4), "log_var mismatch"
    assert jnp.allclose(z, r_z, atol=1e-4, rtol=1e-4), "z mismatch"
    assert jnp.allclose(recon_x, r_recon, atol=1e-4, rtol=1e-4), "recon mismatch"

    print("KERNEL_OK")
</pallas_src>

<mosaic_0001>
module attributes {stable_mosaic.version = 11 : i64} {
  func.func @_linear_kernel(%arg0: i32, %arg1: i32, %arg2: i32, %arg3: memref<8x32xf32, #tpu.memory_space<vmem>>, %arg4: memref<64x32xf32, #tpu.memory_space<vmem>>, %arg5: memref<1x64xf32, #tpu.memory_space<vmem>>, %arg6: memref<8x64xf32, #tpu.memory_space<vmem>>, %arg7: memref<8x64xf32, #tpu.memory_space<vmem>>) attributes {dimension_semantics = [#tpu.dimension_semantics<parallel>, #tpu.dimension_semantics<parallel>, #tpu.dimension_semantics<arbitrary>], iteration_bounds = array<i64: 1, 1, 1>, scalar_prefetch = 0 : i64, scratch_operands = 1 : i64, tpu.core_type = #tpu.core_type<tc>, window_params = [{transform_indices = @transform_0, window_bounds = array<i64: 8, 32>}, {transform_indices = @transform_1, window_bounds = array<i64: 64, 32>}, {transform_indices = @transform_2, window_bounds = array<i64: 1, 64>}, {transform_indices = @transform_3, window_bounds = array<i64: 8, 64>}]} {
    %c0_i32 = arith.constant 0 : i32
    %0 = arith.cmpi eq, %arg2, %c0_i32 : i32
    %1 = arith.extui %0 : i1 to i32
    %c0_i32_0 = arith.constant 0 : i32
    %2 = arith.cmpi ne, %1, %c0_i32_0 : i32
    scf.if %2 {
      %cst_10 = arith.constant 0.000000e+00 : f32
      %12 = vector.broadcast %cst_10 : f32 to vector<8x64xf32>
      %c0_11 = arith.constant 0 : index
      %c0_12 = arith.constant 0 : index
      %13 = vector.load %arg7[%c0_11, %c0_12] : memref<8x64xf32, #tpu.memory_space<vmem>>, vector<8x64xf32>
      tpu.vector_store %arg7[%c0_11, %c0_12], %12 {strides = array<i32>} : memref<8x64xf32, #tpu.memory_space<vmem>>, vector<8x64xf32>,
    } else {
    }
    %c0 = arith.constant 0 : index
    %c0_1 = arith.constant 0 : index
    %3 = vector.load %arg7[%c0, %c0_1] : memref<8x64xf32, #tpu.memory_space<vmem>>, vector<8x64xf32>
    %c0_2 = arith.constant 0 : index
    %c0_3 = arith.constant 0 : index
    %4 = vector.load %arg3[%c0_2, %c0_3] : memref<8x32xf32, #tpu.memory_space<vmem>>, vector<8x32xf32>
    %c0_4 = arith.constant 0 : index
    %c0_5 = arith.constant 0 : index
    %5 = vector.load %arg4[%c0_4, %c0_5] : memref<64x32xf32, #tpu.memory_space<vmem>>, vector<64x32xf32>
    %cst = arith.constant dense<0.000000e+00> : vector<8x64xf32>
    %6 = tpu.matmul %4, %5, %cst {dimension_numbers = #tpu.dot_dimension_numbers<[1], [1], [0], [0], [0, 0, 1, 0], [], []>, precision = #tpu.contract_precision<fp32>} : vector<8x32xf32>, vector<64x32xf32>, vector<8x64xf32> -> vector<8x64xf32>
    %7 = arith.addf %3, %6 : vector<8x64xf32>
    %c0_6 = arith.constant 0 : index
    %c0_7 = arith.constant 0 : index
    %8 = vector.load %arg7[%c0_6, %c0_7] : memref<8x64xf32, #tpu.memory_space<vmem>>, vector<8x64xf32>
    tpu.vector_store %arg7[%c0_6, %c0_7], %7 {strides = array<i32>} : memref<8x64xf32, #tpu.memory_space<vmem>>, vector<8x64xf32>,
    %c0_i32_8 = arith.constant 0 : i32
    %9 = arith.cmpi eq, %arg2, %c0_i32_8 : i32
    %10 = arith.extui %9 : i1 to i32
    %c0_i32_9 = arith.constant 0 : i32
    %11 = arith.cmpi ne, %10, %c0_i32_9 : i32
    scf.if %11 {
      %c0_10 = arith.constant 0 : index
      %c0_11 = arith.constant 0 : index
      %12 = vector.load %arg7[%c0_10, %c0_11] : memref<8x64xf32, #tpu.memory_space<vmem>>, vector<8x64xf32>
      %c0_12 = arith.constant 0 : index
      %c0_13 = arith.constant 0 : index
      %13 = vector.load %arg5[%c0_12, %c0_13] : memref<1x64xf32, #tpu.memory_space<vmem>>, vector<1x64xf32>
      %14 = vector.broadcast %13 : vector<1x64xf32> to vector<8x64xf32>
      %15 = arith.addf %12, %14 : vector<8x64xf32>
      %cst_14 = arith.constant 0.000000e+00 : f32
      %16 = vector.broadcast %cst_14 : f32 to vector<8x64xf32>
      %17 = arith.maximumf %15, %16 : vector<8x64xf32>
      %c0_15 = arith.constant 0 : index
      %c0_16 = arith.constant 0 : index
      %18 = vector.load %arg6[%c0_15, %c0_16] : memref<8x64xf32, #tpu.memory_space<vmem>>, vector<8x64xf32>
      tpu.vector_store %arg6[%c0_15, %c0_16], %17 {strides = array<i32>} : memref<8x64xf32, #tpu.memory_space<vmem>>, vector<8x64xf32>,
    } else {
    }
    return
  }
  func.func @transform_0(%arg0: i32, %arg1: i32, %arg2: i32) -> (i32, i32) {
    %c0_i32 = arith.constant 0 : i32
    return %arg0, %arg2 : i32, i32
  }
  func.func @transform_1(%arg0: i32, %arg1: i32, %arg2: i32) -> (i32, i32) {
    %c0_i32 = arith.constant 0 : i32
    return %arg1, %arg2 : i32, i32
  }
  func.func @transform_2(%arg0: i32, %arg1: i32, %arg2: i32) -> (i32, i32) {
    %c0_i32 = arith.constant 0 : i32
    %c0_i32_0 = arith.constant 0 : i32
    return %c0_i32, %arg1 : i32, i32
  }
  func.func @transform_3(%arg0: i32, %arg1: i32, %arg2: i32) -> (i32, i32) {
    %c0_i32 = arith.constant 0 : i32
    return %arg0, %arg1 : i32, i32
  }
}

</mosaic_0001>

<llo_original>
// kernel: tpu_custom_call.1
$region0: #{tpu_custom_call.1}
  #allocation0 [shape = 'u32[]', space=smem, size = 0x4, offset = 0x4, fixed_abs, tag = 'smem constant byte address 0x4 - core index']
  #allocation1 [shape = 'u32[144,128]{1,0:T(1,128)}', space=vmem, size = 0x12000, scoped, tag = 'internal scratch']
  #allocation2 [shape = 'f32[8,64]{1,0:T(8,128)}', space=vmem, size = 0x1000, scoped, tag = 'scratch operand']
  %s0 = inlined_call_operand.vmem [shape: f32[8,32], index: 0, kind: input, shape index: {}]
  %s1 = inlined_call_operand.vmem [shape: f32[64,32], index: 1, kind: input, shape index: {}]
  %s2 = inlined_call_operand.vmem [shape: f32[1,64], index: 2, kind: input, shape index: {}]
  %s3 = inlined_call_operand.hbm [shape: f32[8,64], index: 3, kind: output, shape index: {}]
  %s4 = sld [smem:[#allocation0]]
  $region30: #{tpu_custom_call.1} parent=0
    _
  %s6 = ssub.s32 1, %s4
  %s7 = scalar_select 0, %s6, %s4
  $region1: #{tpu_custom_call.1} parent=0
    #allocation3 [shape = 'u8[4096]{0}', space=vmem, size = 0x1000, scoped, tag = 'output window, operand 0, single buffered']
    #allocation4 [shape = 's32[1]{0}', space=sflag, size = 0x4, scoped, tag = 'scoped memory for tpu_custom_call.1']
    %8 = vsyncpa [#allocation4], 0
    // Predicated region
    $region2: #{tpu_custom_call.1} parent=1 // pred_check
      _
    $region3: #{tpu_custom_call.1} parent=1 // pred_check_branch
      %10 = sbr.rel (0) target = $region5
    $region4: #{tpu_custom_call.1} parent=1 // pred_region
      _
    $region5: #{tpu_custom_call.1} parent=1 // pred_fallthru
      _
    // Predicated region
    $region6: #{tpu_custom_call.1} parent=1 // pred_check
      _
    $region7: #{tpu_custom_call.1} parent=1 // pred_check_branch
      %12 = sbr.rel (0) target = $region9
    $region8: #{tpu_custom_call.1} parent=1 // pred_region
      _
    $region9: #{tpu_custom_call.1} parent=1 // pred_fallthru
      _
    // Predicated region
    $region10: #{tpu_custom_call.1} parent=1 // pred_check
      _
    $region11: #{tpu_custom_call.1} parent=1 // pred_check_branch
      %14 = sbr.rel (0) target = $region13
    $region12: #{tpu_custom_call.1} parent=1 // pred_region
      _
    $region13: #{tpu_custom_call.1} parent=1 // pred_fallthru
      _
    %p15 = scmp.eq.s32.totalorder 0, 0
    // Predicated region
    $region14: #{tpu_custom_call.1} parent=1 // pred_check
      %p16 = pneg %p15
    $region15: #{tpu_custom_call.1} parent=1 // pred_check_branch
      %18 = sbr.rel (%p16) target = $region17
    $region16: #{tpu_custom_call.1} parent=1 // pred_region
      %vm19 = vcmask 523264
      %20 = vst.msk [vmem:[#allocation2] sm:$0xff] %vm19, 0.0
    $region17: #{tpu_custom_call.1} parent=1 // pred_fallthru
      _
    %v21 = vld [vmem:[#allocation2] sm:$0xff]
    %v22 = vld [vmem:[%s0] sm:$0xff]
    %v23 = vld [vmem:[%s1] sm:$0xff]
    %v24 = vld [vmem:[%s1 + $0x8] sm:$0xff]
    %v25 = vld [vmem:[%s1 + $0x10] sm:$0xff]
    %v26 = vld [vmem:[%s1 + $0x18] sm:$0xff]
    %v27 = vld [vmem:[%s1 + $0x20] sm:$0xff]
    %v28 = vld [vmem:[%s1 + $0x28] sm:$0xff]
    %v29 = vld [vmem:[%s1 + $0x30] sm:$0xff]
    %v30 = vld [vmem:[%s1 + $0x38] sm:$0xff]
    %vm31 = vcmask 261120
    %v33 = vsel %vm31, %v22, 0
    %v36 = vsel %vm31, %v23, 0
    %v39 = vsel %vm31, %v24, 0
    %v42 = vsel %vm31, %v25, 0
    %v45 = vsel %vm31, %v26, 0
    %v48 = vsel %vm31, %v27, 0
    %v51 = vsel %vm31, %v28, 0
    %v54 = vsel %vm31, %v29, 0
    %v57 = vsel %vm31, %v30, 0
    %59 = vmatprep.subr.mxu0 0.0
    %60 = vmatpush1.xpose.msra.mxu0 0.0
    %61 = vmatprep.subr.mxu0 0.0
    %62 = vmatpush1.xpose.msra.mxu0 0.0
    %63 = vmatprep.subr.mxu0 0.0
    %64 = vmatpush1.xpose.msra.mxu0 0.0
    %65 = vmatprep.subr.mxu0 0.0
    %66 = vmatpush1.xpose.msra.mxu0 0.0
    %67 = vmatprep.subr.mxu0 0.0
    %68 = vmatpush1.xpose.msra.mxu0 0.0
    %69 = vmatprep.subr.mxu0 0.0
    %70 = vmatpush1.xpose.msra.mxu0 0.0
    %71 = vmatprep.subr.mxu0 0.0
    %72 = vmatpush1.xpose.msra.mxu0 0.0
    %73 = vmatprep.subr.mxu0 0.0
    %74 = vmatpush1.xpose.msra.mxu0 0.0
    %75 = vmatprep.subr.mxu0 0.0
    %v76 = vand.u32 %v57, 4294901760
    %77 = vmatpush1.xpose.msra.mxu0 %v76
    %78 = vmatprep.subr.mxu0 0.0
    %v79 = vand.u32 %v54, 4294901760
    %80 = vmatpush1.xpose.msra.mxu0 %v79
    %81 = vmatprep.subr.mxu0 0.0
    %v82 = vand.u32 %v51, 4294901760
    %83 = vmatpush1.xpose.msra.mxu0 %v82
    %84 = vmatprep.subr.mxu0 0.0
    %v85 = vand.u32 %v48, 4294901760
    %86 = vmatpush1.xpose.msra.mxu0 %v85
    %87 = vmatprep.subr.mxu0 0.0
    %v88 = vand.u32 %v45, 4294901760
    %89 = vmatpush1.xpose.msra.mxu0 %v88
    %90 = vmatprep.subr.mxu0 0.0
    %v91 = vand.u32 %v42, 4294901760
    %92 = vmatpush1.xpose.msra.mxu0 %v91
    %93 = vmatprep.subr.mxu0 0.0
    %v94 = vand.u32 %v39, 4294901760
    %95 = vmatpush1.xpose.msra.mxu0 %v94
    %96 = vmatprep.subr.mxu0 0.0
    %v97 = vand.u32 %v36, 4294901760
    %98 = vmatpush1.xpose.msra.mxu0 %v97
    %99 = vmatprep.subr.mxu0 0.0
    %100 = vmatpush2.xpose.msra.mxu0 0.0
    %101 = vmatprep.subr.mxu0 0.0
    %102 = vmatpush2.xpose.msra.mxu0 0.0
    %103 = vmatprep.subr.mxu0 0.0
    %104 = vmatpush2.xpose.msra.mxu0 0.0
    %105 = vmatprep.subr.mxu0 0.0
    %106 = vmatpush2.xpose.msra.mxu0 0.0
    %107 = vmatprep.subr.mxu0 0.0
    %108 = vmatpush2.xpose.msra.mxu0 0.0
    %109 = vmatprep.subr.mxu0 0.0
    %110 = vmatpush2.xpose.msra.mxu0 0.0
    %111 = vmatprep.subr.mxu0 0.0
    %112 = vmatpush2.xpose.msra.mxu0 0.0
    %113 = vmatprep.subr.mxu0 0.0
    %114 = vmatpush2.xpose.msra.mxu0 0.0
    %115 = vmatprep.subr.mxu0 0.0
    %116 = vmatpush2.xpose.msra.mxu0 0.0
    %117 = vmatprep.subr.mxu0 0.0
    %118 = vmatpush2.xpose.msra.mxu0 0.0
    %119 = vmatprep.subr.mxu0 0.0
    %120 = vmatpush2.xpose.msra.mxu0 0.0
    %121 = vmatprep.subr.mxu0 0.0
    %122 = vmatpush2.xpose.msra.mxu0 0.0
    %123 = vmatprep.subr.mxu0 0.0
    %124 = vmatpush2.xpose.msra.mxu0 0.0
    %125 = vmatprep.subr.mxu0 0.0
    %126 = vmatpush2.xpose.msra.mxu0 0.0
    %127 = vmatprep.subr.mxu0 0.0
    %128 = vmatpush2.xpose.msra.mxu0 0.0
    %129 = vmatprep.subr.mxu0 0.0
    %130 = vmatpush2.xpose.msra.mxu0 0.0
    %131 = vmatprep.mubr.f32.mxu0 0.0
    %v132 = vand.u32 %v33, 4294901760
    %v133 = vsub.f32 %v33, %v132
    %v134 = vand.u32 %v133, 4294901760
    %v135 = vsub.f32 %v133, %v134
    %v136 = vand.u32 %v135, 4294901760
    %137 = vmatmul.mubr.f32.gmra.mxu0 %v136
    %v138 = vpop.f32.mrf.mxu0
    %v139 = vadd.f32 0.0, %v138
    %v140 = vpop.f32.mrf.mxu0
    %141 = vdwg.mxu0
    %142 = vmatprep.subr.mxu0 0.0
    %143 = vmatpush1.xpose.msra.mxu0 0.0
    %144 = vmatprep.subr.mxu0 0.0
    %145 = vmatpush1.xpose.msra.mxu0 0.0
    %146 = vmatprep.subr.mxu0 0.0
    %147 = vmatpush1.xpose.msra.mxu0 0.0
    %148 = vmatprep.subr.mxu0 0.0
    %149 = vmatpush1.xpose.msra.mxu0 0.0
    %150 = vmatprep.subr.mxu0 0.0
    %151 = vmatpush1.xpose.msra.mxu0 0.0
    %152 = vmatprep.subr.mxu0 0.0
    %153 = vmatpush1.xpose.msra.mxu0 0.0
    %154 = vmatprep.subr.mxu0 0.0
    %155 = vmatpush1.xpose.msra.mxu0 0.0
    %156 = vmatprep.subr.mxu0 0.0
    %157 = vmatpush1.xpose.msra.mxu0 0.0
    %158 = vmatprep.subr.mxu0 0.0
    %v159 = vand.u32 %v57, 4294901760
    %v160 = vsub.f32 %v57, %v159
    %v161 = vand.u32 %v160, 4294901760
    %v162 = vsub.f32 %v160, %v161
    %v163 = vand.u32 %v162, 4294901760
    %164 = vmatpush1.xpose.msra.mxu0 %v163
    %165 = vmatprep.subr.mxu0 0.0
    %v166 = vand.u32 %v54, 4294901760
    %v167 = vsub.f32 %v54, %v166
    %v168 = vand.u32 %v167, 4294901760
    %v169 = vsub.f32 %v167, %v168
    %v170 = vand.u32 %v169, 4294901760
    %171 = vmatpush1.xpose.msra.mxu0 %v170
    %172 = vmatprep.subr.mxu0 0.0
    %v173 = vand.u32 %v51, 4294901760
    %v174 = vsub.f32 %v51, %v173
    %v175 = vand.u32 %v174, 4294901760
    %v176 = vsub.f32 %v174, %v175
    %v177 = vand.u32 %v176, 4294901760
    %178 = vmatpush1.xpose.msra.mxu0 %v177
    %179 = vmatprep.subr.mxu0 0.0
    %v180 = vand.u32 %v48, 4294901760
    %v181 = vsub.f32 %v48, %v180
    %v182 = vand.u32 %v181, 4294901760
    %v183 = vsub.f32 %v181, %v182
    %v184 = vand.u32 %v183, 4294901760
    %185 = vmatpush1.xpose.msra.mxu0 %v184
    %186 = vmatprep.subr.mxu0 0.0
    %v187 = vand.u32 %v45, 4294901760
    %v188 = vsub.f32 %v45, %v187
    %v189 = vand.u32 %v188, 4294901760
    %v190 = vsub.f32 %v188, %v189
    %v191 = vand.u32 %v190, 4294901760
    %192 = vmatpush1.xpose.msra.mxu0 %v191
    %193 = vmatprep.subr.mxu0 0.0
    %v194 = vand.u32 %v42, 4294901760
    %v195 = vsub.f32 %v42, %v194
    %v196 = vand.u32 %v195, 4294901760
    %v197 = vsub.f32 %v195, %v196
    %v198 = vand.u32 %v197, 4294901760
    %199 = vmatpush1.xpose.msra.mxu0 %v198
    %200 = vmatprep.subr.mxu0 0.0
    %v201 = vand.u32 %v39, 4294901760
    %v202 = vsub.f32 %v39, %v201
    %v203 = vand.u32 %v202, 4294901760
    %v204 = vsub.f32 %v202, %v203
    %v205 = vand.u32 %v204, 4294901760
    %206 = vmatpush1.xpose.msra.mxu0 %v205
    %207 = vmatprep.subr.mxu0 0.0
    %v208 = vand.u32 %v36, 4294901760
    %v209 = vsub.f32 %v36, %v208
    %v210 = vand.u32 %v209, 4294901760
    %v211 = vsub.f32 %v209, %v210
    %v212 = vand.u32 %v211, 4294901760
    %213 = vmatpush1.xpose.msra.mxu0 %v212
    %214 = vmatprep.subr.mxu0 0.0
    %215 = vmatpush2.xpose.msra.mxu0 0.0
    %216 = vmatprep.subr.mxu0 0.0
    %217 = vmatpush2.xpose.msra.mxu0 0.0
    %218 = vmatprep.subr.mxu0 0.0
    %219 = vmatpush2.xpose.msra.mxu0 0.0
    %220 = vmatprep.subr.mxu0 0.0
    %221 = vmatpush2.xpose.msra.mxu0 0.0
    %222 = vmatprep.subr.mxu0 0.0
    %223 = vmatpush2.xpose.msra.mxu0 0.0
    %224 = vmatprep.subr.mxu0 0.0
    %225 = vmatpush2.xpose.msra.mxu0 0.0
    %226 = vmatprep.subr.mxu0 0.0
    %227 = vmatpush2.xpose.msra.mxu0 0.0
    %228 = vmatprep.subr.mxu0 0.0
    %229 = vmatpush2.xpose.msra.mxu0 0.0
    %230 = vmatprep.subr.mxu0 0.0
    %231 = vmatpush2.xpose.msra.mxu0 0.0
    %232 = vmatprep.subr.mxu0 0.0
    %233 = vmatpush2.xpose.msra.mxu0 0.0
    %234 = vmatprep.subr.mxu0 0.0
    %235 = vmatpush2.xpose.msra.mxu0 0.0
    %236 = vmatprep.subr.mxu0 0.0
    %237 = vmatpush2.xpose.msra.mxu0 0.0
    %238 = vmatprep.subr.mxu0 0.0
    %239 = vmatpush2.xpose.msra.mxu0 0.0
    %240 = vmatprep.subr.mxu0 0.0
    %241 = vmatpush2.xpose.msra.mxu0 0.0
    %242 = vmatprep.subr.mxu0 0.0
    %243 = vmatpush2.xpose.msra.mxu0 0.0
    %244 = vmatprep.subr.mxu0 0.0
    %245 = vmatpush2.xpose.msra.mxu0 0.0
    %246 = vmatprep.mubr.f32.mxu0 0.0
    %v247 = vand.u32 %v33, 4294901760
    %248 = vmatmul.mubr.f32.gmra.mxu0 %v247
    %v249 = vpop.f32.mrf.mxu0
    %v250 = vadd.f32 %v139, %v249
    %v251 = vpop.f32.mrf.mxu0
    %252 = vdwg.mxu0
    %253 = vmatprep.subr.mxu0 0.0
    %254 = vmatpush1.xpose.msra.mxu0 0.0
    %255 = vmatprep.subr.mxu0 0.0
    %256 = vmatpush1.xpose.msra.mxu0 0.0
    %257 = vmatprep.subr.mxu0 0.0
    %258 = vmatpush1.xpose.msra.mxu0 0.0
    %259 = vmatprep.subr.mxu0 0.0
    %260 = vmatpush1.xpose.msra.mxu0 0.0
    %261 = vmatprep.subr.mxu0 0.0
    %262 = vmatpush1.xpose.msra.mxu0 0.0
    %263 = vmatprep.subr.mxu0 0.0
    %264 = vmatpush1.xpose.msra.mxu0 0.0
    %265 = vmatprep.subr.mxu0 0.0
    %266 = vmatpush1.xpose.msra.mxu0 0.0
    %267 = vmatprep.subr.mxu0 0.0
    %268 = vmatpush1.xpose.msra.mxu0 0.0
    %269 = vmatprep.subr.mxu0 0.0
    %v270 = vand.u32 %v57, 4294901760
    %v271 = vsub.f32 %v57, %v270
    %272 = vmatpush1.xpose.msra.mxu0 %v271
    %273 = vmatprep.subr.mxu0 0.0
    %v274 = vand.u32 %v54, 4294901760
    %v275 = vsub.f32 %v54, %v274
    %276 = vmatpush1.xpose.msra.mxu0 %v275
    %277 = vmatprep.subr.mxu0 0.0
    %v278 = vand.u32 %v51, 4294901760
    %v279 = vsub.f32 %v51, %v278
    %280 = vmatpush1.xpose.msra.mxu0 %v279
    %281 = vmatprep.subr.mxu0 0.0
    %v282 = vand.u32 %v48, 4294901760
    %v283 = vsub.f32 %v48, %v282
    %284 = vmatpush1.xpose.msra.mxu0 %v283
    %285 = vmatprep.subr.mxu0 0.0
    %v286 = vand.u32 %v45, 4294901760
    %v287 = vsub.f32 %v45, %v286
    %288 = vmatpush1.xpose.msra.mxu0 %v287
    %289 = vmatprep.subr.mxu0 0.0
    %v290 = vand.u32 %v42, 4294901760
    %v291 = vsub.f32 %v42, %v290
    %292 = vmatpush1.xpose.msra.mxu0 %v291
    %293 = vmatprep.subr.mxu0 0.0
    %v294 = vand.u32 %v39, 4294901760
    %v295 = vsub.f32 %v39, %v294
    %296 = vmatpush1.xpose.msra.mxu0 %v295
    %297 = vmatprep.subr.mxu0 0.0
    %v298 = vand.u32 %v36, 4294901760
    %v299 = vsub.f32 %v36, %v298
    %300 = vmatpush1.xpose.msra.mxu0 %v299
    %301 = vmatprep.subr.mxu0 0.0
    %302 = vmatpush2.xpose.msra.mxu0 0.0
    %303 = vmatprep.subr.mxu0 0.0
    %304 = vmatpush2.xpose.msra.mxu0 0.0
    %305 = vmatprep.subr.mxu0 0.0
    %306 = vmatpush2.xpose.msra.mxu0 0.0
    %307 = vmatprep.subr.mxu0 0.0
    %308 = vmatpush2.xpose.msra.mxu0 0.0
    %309 = vmatprep.subr.mxu0 0.0
    %310 = vmatpush2.xpose.msra.mxu0 0.0
    %311 = vmatprep.subr.mxu0 0.0
    %312 = vmatpush2.xpose.msra.mxu0 0.0
    %313 = vmatprep.subr.mxu0 0.0
    %314 = vmatpush2.xpose.msra.mxu0 0.0
    %315 = vmatprep.subr.mxu0 0.0
    %316 = vmatpush2.xpose.msra.mxu0 0.0
    %317 = vmatprep.subr.mxu0 0.0
    %318 = vmatpush2.xpose.msra.mxu0 0.0
    %319 = vmatprep.subr.mxu0 0.0
    %320 = vmatpush2.xpose.msra.mxu0 0.0
    %321 = vmatprep.subr.mxu0 0.0
    %322 = vmatpush2.xpose.msra.mxu0 0.0
    %323 = vmatprep.subr.mxu0 0.0
    %324 = vmatpush2.xpose.msra.mxu0 0.0
    %325 = vmatprep.subr.mxu0 0.0
    %326 = vmatpush2.xpose.msra.mxu0 0.0
    %327 = vmatprep.subr.mxu0 0.0
    %328 = vmatpush2.xpose.msra.mxu0 0.0
    %329 = vmatprep.subr.mxu0 0.0
    %330 = vmatpush2.xpose.msra.mxu0 0.0
    %331 = vmatprep.subr.mxu0 0.0
    %332 = vmatpush2.xpose.msra.mxu0 0.0
    %333 = vmatprep.mubr.f32.mxu0 0.0
    %v334 = vand.u32 %v33, 4294901760
    %v335 = vsub.f32 %v33, %v334
    %336 = vmatmul.mubr.f32.gmra.mxu0 %v335
    %v337 = vpop.f32.mrf.mxu0
    %v338 = vadd.f32 %v250, %v337
    %v339 = vpop.f32.mrf.mxu0
    %340 = vdwg.mxu0
    %341 = vmatprep.subr.mxu0 0.0
    %342 = vmatpush1.xpose.msra.mxu0 0.0
    %343 = vmatprep.subr.mxu0 0.0
    %344 = vmatpush1.xpose.msra.mxu0 0.0
    %345 = vmatprep.subr.mxu0 0.0
    %346 = vmatpush1.xpose.msra.mxu0 0.0
    %347 = vmatprep.subr.mxu0 0.0
    %348 = vmatpush1.xpose.msra.mxu0 0.0
    %349 = vmatprep.subr.mxu0 0.0
    %350 = vmatpush1.xpose.msra.mxu0 0.0
    %351 = vmatprep.subr.mxu0 0.0
    %352 = vmatpush1.xpose.msra.mxu0 0.0
    %353 = vmatprep.subr.mxu0 0.0
    %354 = vmatpush1.xpose.msra.mxu0 0.0
    %355 = vmatprep.subr.mxu0 0.0
    %356 = vmatpush1.xpose.msra.mxu0 0.0
    %357 = vmatprep.subr.mxu0 0.0
    %v358 = vand.u32 %v57, 4294901760
    %359 = vmatpush1.xpose.msra.mxu0 %v358
    %360 = vmatprep.subr.mxu0 0.0
    %v361 = vand.u32 %v54, 4294901760
    %362 = vmatpush1.xpose.msra.mxu0 %v361
    %363 = vmatprep.subr.mxu0 0.0
    %v364 = vand.u32 %v51, 4294901760
    %365 = vmatpush1.xpose.msra.mxu0 %v364
    %366 = vmatprep.subr.mxu0 0.0
    %v367 = vand.u32 %v48, 4294901760
    %368 = vmatpush1.xpose.msra.mxu0 %v367
    %369 = vmatprep.subr.mxu0 0.0
    %v370 = vand.u32 %v45, 4294901760
    %371 = vmatpush1.xpose.msra.mxu0 %v370
    %372 = vmatprep.subr.mxu0 0.0
    %v373 = vand.u32 %v42, 4294901760
    %374 = vmatpush1.xpose.msra.mxu0 %v373
    %375 = vmatprep.subr.mxu0 0.0
    %v376 = vand.u32 %v39, 4294901760
    %377 = vmatpush1.xpose.msra.mxu0 %v376
    %378 = vmatprep.subr.mxu0 0.0
    %v379 = vand.u32 %v36, 4294901760
    %380 = vmatpush1.xpose.msra.mxu0 %v379
    %381 = vmatprep.subr.mxu0 0.0
    %382 = vmatpush2.xpose.msra.mxu0 0.0
    %383 = vmatprep.subr.mxu0 0.0
    %384 = vmatpush2.xpose.msra.mxu0 0.0
    %385 = vmatprep.subr.mxu0 0.0
    %386 = vmatpush2.xpose.msra.mxu0 0.0
    %387 = vmatprep.subr.mxu0 0.0
    %388 = vmatpush2.xpose.msra.mxu0 0.0
    %389 = vmatprep.subr.mxu0 0.0
    %390 = vmatpush2.xpose.msra.mxu0 0.0
    %391 = vmatprep.subr.mxu0 0.0
    %392 = vmatpush2.xpose.msra.mxu0 0.0
    %393 = vmatprep.subr.mxu0 0.0
    %394 = vmatpush2.xpose.msra.mxu0 0.0
    %395 = vmatprep.subr.mxu0 0.0
    %396 = vmatpush2.xpose.msra.mxu0 0.0
    %397 = vmatprep.subr.mxu0 0.0
    %398 = vmatpush2.xpose.msra.mxu0 0.0
    %399 = vmatprep.subr.mxu0 0.0
    %400 = vmatpush2.xpose.msra.mxu0 0.0
    %401 = vmatprep.subr.mxu0 0.0
    %402 = vmatpush2.xpose.msra.mxu0 0.0
    %403 = vmatprep.subr.mxu0 0.0
    %404 = vmatpush2.xpose.msra.mxu0 0.0
    %405 = vmatprep.subr.mxu0 0.0
    %406 = vmatpush2.xpose.msra.mxu0 0.0
    %407 = vmatprep.subr.mxu0 0.0
    %408 = vmatpush2.xpose.msra.mxu0 0.0
    %409 = vmatprep.subr.mxu0 0.0
    %410 = vmatpush2.xpose.msra.mxu0 0.0
    %411 = vmatprep.subr.mxu0 0.0
    %412 = vmatpush2.xpose.msra.mxu0 0.0
    %413 = vmatprep.mubr.f32.mxu0 0.0
    %v414 = vand.u32 %v33, 4294901760
    %v415 = vsub.f32 %v33, %v414
    %v416 = vand.u32 %v415, 4294901760
    %417 = vmatmul.mubr.f32.gmra.mxu0 %v416
    %v418 = vpop.f32.mrf.mxu0
    %v419 = vadd.f32 %v338, %v418
    %v420 = vpop.f32.mrf.mxu0
    %421 = vdwg.mxu0
    %422 = vmatprep.subr.mxu0 0.0
    %423 = vmatpush1.xpose.msra.mxu0 0.0
    %424 = vmatprep.subr.mxu0 0.0
    %425 = vmatpush1.xpose.msra.mxu0 0.0
    %426 = vmatprep.subr.mxu0 0.0
    %427 = vmatpush1.xpose.msra.mxu0 0.0
    %428 = vmatprep.subr.mxu0 0.0
    %429 = vmatpush1.xpose.msra.mxu0 0.0
    %430 = vmatprep.subr.mxu0 0.0
    %431 = vmatpush1.xpose.msra.mxu0 0.0
    %432 = vmatprep.subr.mxu0 0.0
    %433 = vmatpush1.xpose.msra.mxu0 0.0
    %434 = vmatprep.subr.mxu0 0.0
    %435 = vmatpush1.xpose.msra.mxu0 0.0
    %436 = vmatprep.subr.mxu0 0.0
    %437 = vmatpush1.xpose.msra.mxu0 0.0
    %438 = vmatprep.subr.mxu0 0.0
    %v439 = vand.u32 %v57, 4294901760
    %v440 = vsub.f32 %v57, %v439
    %v441 = vand.u32 %v440, 4294901760
    %442 = vmatpush1.xpose.msra.mxu0 %v441
    %443 = vmatprep.subr.mxu0 0.0
    %v444 = vand.u32 %v54, 4294901760
    %v445 = vsub.f32 %v54, %v444
    %v446 = vand.u32 %v445, 4294901760
    %447 = vmatpush1.xpose.msra.mxu0 %v446
    %448 = vmatprep.subr.mxu0 0.0
    %v449 = vand.u32 %v51, 4294901760
    %v450 = vsub.f32 %v51, %v449
    %v451 = vand.u32 %v450, 4294901760
    %452 = vmatpush1.xpose.msra.mxu0 %v451
    %453 = vmatprep.subr.mxu0 0.0
    %v454 = vand.u32 %v48, 4294901760
    %v455 = vsub.f32 %v48, %v454
    %v456 = vand.u32 %v455, 4294901760
    %457 = vmatpush1.xpose.msra.mxu0 %v456
    %458 = vmatprep.subr.mxu0 0.0
    %v459 = vand.u32 %v45, 4294901760
    %v460 = vsub.f32 %v45, %v459
    %v461 = vand.u32 %v460, 4294901760
    %462 = vmatpush1.xpose.msra.mxu0 %v461
    %463 = vmatprep.subr.mxu0 0.0
    %v464 = vand.u32 %v42, 4294901760
    %v465 = vsub.f32 %v42, %v464
    %v466 = vand.u32 %v465, 4294901760
    %467 = vmatpush1.xpose.msra.mxu0 %v466
    %468 = vmatprep.subr.mxu0 0.0
    %v469 = vand.u32 %v39, 4294901760
    %v470 = vsub.f32 %v39, %v469
    %v471 = vand.u32 %v470, 4294901760
    %472 = vmatpush1.xpose.msra.mxu0 %v471
    %473 = vmatprep.subr.mxu0 0.0
    %v474 = vand.u32 %v36, 4294901760
    %v475 = vsub.f32 %v36, %v474
    %v476 = vand.u32 %v475, 4294901760
    %477 = vmatpush1.xpose.msra.mxu0 %v476
    %478 = vmatprep.subr.mxu0 0.0
    %479 = vmatpush2.xpose.msra.mxu0 0.0
    %480 = vmatprep.subr.mxu0 0.0
    %481 = vmatpush2.xpose.msra.mxu0 0.0
    %482 = vmatprep.subr.mxu0 0.0
    %483 = vmatpush2.xpose.msra.mxu0 0.0
    %484 = vmatprep.subr.mxu0 0.0
    %485 = vmatpush2.xpose.msra.mxu0 0.0
    %486 = vmatprep.subr.mxu0 0.0
    %487 = vmatpush2.xpose.msra.mxu0 0.0
    %488 = vmatprep.subr.mxu0 0.0
    %489 = vmatpush2.xpose.msra.mxu0 0.0
    %490 = vmatprep.subr.mxu0 0.0
    %491 = vmatpush2.xpose.msra.mxu0 0.0
    %492 = vmatprep.subr.mxu0 0.0
    %493 = vmatpush2.xpose.msra.mxu0 0.0
    %494 = vmatprep.subr.mxu0 0.0
    %495 = vmatpush2.xpose.msra.mxu0 0.0
    %496 = vmatprep.subr.mxu0 0.0
    %497 = vmatpush2.xpose.msra.mxu0 0.0
    %498 = vmatprep.subr.mxu0 0.0
    %499 = vmatpush2.xpose.msra.mxu0 0.0
    %500 = vmatprep.subr.mxu0 0.0
    %501 = vmatpush2.xpose.msra.mxu0 0.0
    %502 = vmatprep.subr.mxu0 0.0
    %503 = vmatpush2.xpose.msra.mxu0 0.0
    %504 = vmatprep.subr.mxu0 0.0
    %505 = vmatpush2.xpose.msra.mxu0 0.0
    %506 = vmatprep.subr.mxu0 0.0
    %507 = vmatpush2.xpose.msra.mxu0 0.0
    %508 = vmatprep.subr.mxu0 0.0
    %509 = vmatpush2.xpose.msra.mxu0 0.0
    %510 = vmatprep.mubr.f32.mxu0 0.0
    %v511 = vand.u32 %v33, 4294901760
    %512 = vmatmul.mubr.f32.gmra.mxu0 %v511
    %v513 = vpop.f32.mrf.mxu0
    %v514 = vadd.f32 %v419, %v513
    %v515 = vpop.f32.mrf.mxu0
    %516 = vdwg.mxu0
    %517 = vmatprep.subr.mxu0 0.0
    %518 = vmatpush1.xpose.msra.mxu0 0.0
    %519 = vmatprep.subr.mxu0 0.0
    %520 = vmatpush1.xpose.msra.mxu0 0.0
    %521 = vmatprep.subr.mxu0 0.0
    %522 = vmatpush1.xpose.msra.mxu0 0.0
    %523 = vmatprep.subr.mxu0 0.0
    %524 = vmatpush1.xpose.msra.mxu0 0.0
    %525 = vmatprep.subr.mxu0 0.0
    %526 = vmatpush1.xpose.msra.mxu0 0.0
    %527 = vmatprep.subr.mxu0 0.0
    %528 = vmatpush1.xpose.msra.mxu0 0.0
    %529 = vmatprep.subr.mxu0 0.0
    %530 = vmatpush1.xpose.msra.mxu0 0.0
    %531 = vmatprep.subr.mxu0 0.0
    %532 = vmatpush1.xpose.msra.mxu0 0.0
    %533 = vmatprep.subr.mxu0 0.0
    %v534 = vand.u32 %v57, 4294901760
    %535 = vmatpush1.xpose.msra.mxu0 %v534
    %536 = vmatprep.subr.mxu0 0.0
    %v537 = vand.u32 %v54, 4294901760
    %538 = vmatpush1.xpose.msra.mxu0 %v537
    %539 = vmatprep.subr.mxu0 0.0
    %v540 = vand.u32 %v51, 4294901760
    %541 = vmatpush1.xpose.msra.mxu0 %v540
    %542 = vmatprep.subr.mxu0 0.0
    %v543 = vand.u32 %v48, 4294901760
    %544 = vmatpush1.xpose.msra.mxu0 %v543
    %545 = vmatprep.subr.mxu0 0.0
    %v546 = vand.u32 %v45, 4294901760
    %547 = vmatpush1.xpose.msra.mxu0 %v546
    %548 = vmatprep.subr.mxu0 0.0
    %v549 = vand.u32 %v42, 4294901760
    %550 = vmatpush1.xpose.msra.mxu0 %v549
    %551 = vmatprep.subr.mxu0 0.0
    %v552 = vand.u32 %v39, 4294901760
    %553 = vmatpush1.xpose.msra.mxu0 %v552
    %554 = vmatprep.subr.mxu0 0.0
    %v555 = vand.u32 %v36, 4294901760
    %556 = vmatpush1.xpose.msra.mxu0 %v555
    %557 = vmatprep.subr.mxu0 0.0
    %558 = vmatpush2.xpose.msra.mxu0 0.0
    %559 = vmatprep.subr.mxu0 0.0
    %560 = vmatpush2.xpose.msra.mxu0 0.0
    %561 = vmatprep.subr.mxu0 0.0
    %562 = vmatpush2.xpose.msra.mxu0 0.0
    %563 = vmatprep.subr.mxu0 0.0
    %564 = vmatpush2.xpose.msra.mxu0 0.0
    %565 = vmatprep.subr.mxu0 0.0
    %566 = vmatpush2.xpose.msra.mxu0 0.0
    %567 = vmatprep.subr.mxu0 0.0
    %568 = vmatpush2.xpose.msra.mxu0 0.0
    %569 = vmatprep.subr.mxu0 0.0
    %570 = vmatpush2.xpose.msra.mxu0 0.0
    %571 = vmatprep.subr.mxu0 0.0
    %572 = vmatpush2.xpose.msra.mxu0 0.0
    %573 = vmatprep.subr.mxu0 0.0
    %574 = vmatpush2.xpose.msra.mxu0 0.0
    %575 = vmatprep.subr.mxu0 0.0
    %576 = vmatpush2.xpose.msra.mxu0 0.0
    %577 = vmatprep.subr.mxu0 0.0
    %578 = vmatpush2.xpose.msra.mxu0 0.0
    %579 = vmatprep.subr.mxu0 0.0
    %580 = vmatpush2.xpose.msra.mxu0 0.0
    %581 = vmatprep.subr.mxu0 0.0
    %582 = vmatpush2.xpose.msra.mxu0 0.0
    %583 = vmatprep.subr.mxu0 0.0
    %584 = vmatpush2.xpose.msra.mxu0 0.0
    %585 = vmatprep.subr.mxu0 0.0
    %586 = vmatpush2.xpose.msra.mxu0 0.0
    %587 = vmatprep.subr.mxu0 0.0
    %588 = vmatpush2.xpose.msra.mxu0 0.0
    %589 = vmatprep.mubr.f32.mxu0 0.0
    %v590 = vand.u32 %v33, 4294901760
    %591 = vmatmul.mubr.f32.gmra.mxu0 %v590
    %v592 = vpop.f32.mrf.mxu0
    %v593 = vadd.f32 %v514, %v592
    %v594 = vpop.f32.mrf.mxu0
    %595 = vdwg.mxu0
    %v596 = vadd.f32 %v21, %v593
    %vm597 = vcmask 523264
    %598 = vst.msk [vmem:[#allocation2] sm:$0xff] %vm597, %v596
    // Predicated region
    $region18: #{tpu_custom_call.1} parent=1 // pred_check
      %p599 = pneg %p15
    $region19: #{tpu_custom_call.1} parent=1 // pred_check_branch
      %601 = sbr.rel (%p599) target = $region21
    $region20: #{tpu_custom_call.1} parent=1 // pred_region
      %v602 = vld [vmem:[#allocation2] sm:$0xff]
      %v603 = vld [vmem:[%s2] sm:$0x1]
      %v605 = vlaneseq
      %v606 = vshrl.u32 %v605, 7
      %v607 = vsub.s32 0, %v606
      %v608 = vrot.slane %v603, %v607
      %v610 = vadd.f32 %v602, %v608
      %v611 = vmax.f32 %v610, 0.0
      %612 = vst.msk [vmem:[#allocation3] sm:$0xff] %vm597, %v611
    $region21: #{tpu_custom_call.1} parent=1 // pred_fallthru
      _
    // Predicated region
    $region22: #{tpu_custom_call.1} parent=1 // pred_check
      _
    $region23: #{tpu_custom_call.1} parent=1 // pred_check_branch
      %614 = sbr.rel (0) target = $region25
    $region24: #{tpu_custom_call.1} parent=1 // pred_region
      %s616 = ssub.s32 128, 128
      %617 = vsyncadd [#allocation4], %s616
      %s619 = sshll.u32 [#allocation3], 4
      %s620 = int_to_ptr.vmem [resolvable:$true] %s619
      %622 = dma.vmem_to_hbm [thread:$0]  %s620, 128, %s3, [#allocation4]
    $region25: #{tpu_custom_call.1} parent=1 // pred_fallthru
      _
    // Predicated region
    $region26: #{tpu_custom_call.1} parent=1 // pred_check
      _
    $region27: #{tpu_custom_call.1} parent=1 // pred_check_branch
      %624 = sbr.rel (0) target = $region29
    $region28: #{tpu_custom_call.1} parent=1 // pred_region
      %625 = dma.done [#allocation4], 128
    $region29: #{tpu_custom_call.1} parent=1 // pred_fallthru
      _
    %626 = vsyncpa [#allocation4], 1

</llo_original>
